<compile_context>
chip_gen: v5e
topology: v5e:2x2
jax: 0.10.0
libtpu: 0.0.40
codegen_flags: <defaults>
</compile_context>

<pallas_src>
import math
import functools

import jax
import jax.numpy as jnp
from jax.experimental import pallas as pl
from jax.experimental.pallas import tpu as pltpu


# ----------------------------- Pallas kernels -----------------------------

def _heaviside_kernel(x_ref, o_ref):
    # Matches the PyTorch spec's heaviside: (x >= 0) -> 1 (including x == 0).
    o_ref[...] = (x_ref[...] >= 0).astype(o_ref.dtype)


def _atan_primitive_kernel(alpha, x_ref, o_ref):
    # Evaluate in f32 regardless of input dtype; cast only at the end.
    # (/pi folded into a single multiply to keep VALU work minimal.)
    x = x_ref[...].astype(jnp.float32)
    y = jnp.arctan((math.pi / 2.0) * alpha * x) * (1.0 / math.pi) + 0.5
    o_ref[...] = y.astype(o_ref.dtype)


# ----------------------------- plain-jnp fallbacks -----------------------------

def _heaviside_jnp(x):
    return (x >= 0).astype(x.dtype)


def _atan_primitive_jnp(x, alpha):
    xf = x.astype(jnp.float32)
    y = jnp.arctan((math.pi / 2.0) * alpha * xf) * (1.0 / math.pi) + 0.5
    return y.astype(x.dtype)


# ----------------------------- wrapper helpers -----------------------------

_LANES = 128
# ~4 MiB per block: double-buffered in+out -> ~16 MiB VMEM footprint, within
# the raised scoped limit below and well under physical VMEM on v5e/v6e (128
# MiB) and v7x (64 MiB / TC).
_TARGET_BLOCK_BYTES = 4 * 1024 * 1024
_VMEM_LIMIT_BYTES = 48 << 20
# Guarantee enough grid steps for megacore sharding (v7x: 2 TCs) + pipelining.
_MIN_GRID_STEPS = 4
# Below this, pallas_call launch + per-step overhead dominates; use fused XLA.
_SMALL_INPUT_ELEMS = 1 << 16


def _round_up(v, m):
    return ((v + m - 1) // m) * m


def _ceil_div(a, b):
    return (a + b - 1) // b


def _min_sublanes_for(itemsize):
    # f32 -> 8, bf16/f16 -> 16, int8/fp8 -> 32 (packed-dtype minimum tile).
    return max(8, 32 // max(1, itemsize))


def _choose_block_rows(rows, itemsize):
    min_sub = _min_sublanes_for(itemsize)
    target_rows = max(
        min_sub,
        (_TARGET_BLOCK_BYTES // (_LANES * itemsize)) // min_sub * min_sub,
    )
    # Shrink the block so the grid has at least _MIN_GRID_STEPS steps.
    per_step_rows = _round_up(_ceil_div(rows, _MIN_GRID_STEPS), min_sub)
    block_rows = max(min_sub, min(target_rows, per_step_rows))
    # Never larger than the (sublane-rounded) full extent.
    block_rows = min(block_rows, _round_up(rows, min_sub))
    return block_rows


def _run_elementwise(pallas_kernel, jnp_fn, x, *, transcendental=False):
    """Run an elementwise op: Pallas on the lane-aligned bulk, jnp on tiny/tail."""
    orig_shape = x.shape
    orig_dtype = x.dtype
    n = x.size

    if n == 0 or n < _SMALL_INPUT_ELEMS:
        # Tiny input: fused XLA elementwise is strictly cheaper than a launch.
        return jnp_fn(x)

    flat = x.reshape(-1)
    tail = n % _LANES
    aligned = n - tail
    prefix = flat[:aligned] if tail else flat

    rows = aligned // _LANES
    x2d = prefix.reshape(rows, _LANES)

    itemsize = jnp.dtype(orig_dtype).itemsize
    block_rows = _choose_block_rows(rows, itemsize)
    grid = (pl.cdiv(rows, block_rows),)  # partial last block masked by Pallas

    cost = pl.CostEstimate(
        flops=aligned,
        transcendentals=aligned if transcendental else 0,
        bytes_accessed=2 * aligned * itemsize,
    )

    out2d = pl.pallas_call(
        pallas_kernel,
        out_shape=jax.ShapeDtypeStruct((rows, _LANES), orig_dtype),
        grid=grid,
        in_specs=[pl.BlockSpec((block_rows, _LANES), lambda i: (i, 0))],
        out_specs=pl.BlockSpec((block_rows, _LANES), lambda i: (i, 0)),
        compiler_params=pltpu.CompilerParams(
            dimension_semantics=("parallel",),
            vmem_limit_bytes=_VMEM_LIMIT_BYTES,
        ),
        cost_estimate=cost,
    )(x2d)

    out_flat = out2d.reshape(-1)
    if tail:
        # Handle the <128-element tail with a plain jnp op (no full-tensor pad).
        out_flat = jnp.concatenate([out_flat, jnp_fn(flat[aligned:])])
    return out_flat.reshape(orig_shape)


# ----------------------------- spiking path with surrogate gradient -----------------------------

@functools.partial(jax.custom_vjp, nondiff_argnums=(1, 2, 3))
def _atan_spike(x, alpha, norm_factor, scale_factor):
    return _run_elementwise(_heaviside_kernel, _heaviside_jnp, x)


def _atan_spike_fwd(x, alpha, norm_factor, scale_factor):
    return _atan_spike(x, alpha, norm_factor, scale_factor), x


def _atan_spike_bwd(alpha, norm_factor, scale_factor, x, g):
    # grad_x = scale * alpha / 2 / (1 + (pi/2 * alpha * x / norm)^2) * g
    xf = x.astype(jnp.float32)
    denom = 1.0 + jnp.square((math.pi / 2.0) * alpha * xf / norm_factor)
    grad_x = (scale_factor * alpha / 2.0) / denom * g.astype(jnp.float32)
    return (grad_x.astype(x.dtype),)


_atan_spike.defvjp(_atan_spike_fwd, _atan_spike_bwd)


def _atan_primitive(x, alpha):
    return _run_elementwise(
        functools.partial(_atan_primitive_kernel, alpha),
        functools.partial(_atan_primitive_jnp, alpha=alpha),
        x,
        transcendental=True,
    )


# ----------------------------- module equivalent -----------------------------

class ATanGradRefine:
    """JAX/Pallas equivalent of the PyTorch ATan_GradRefine module."""

    def __init__(self, alpha=2.0, spiking=True):
        self.alpha = float(alpha)
        self.spiking = spiking

    def set_spiking_mode(self, spiking):
        self.spiking = spiking

    def __call__(self, x, norm=1.0, scale=1.0, grad_l_1=None, grad_l=None):
        if self.spiking:
            # TODO(synk): rgrad variant's grad_l_1/grad_l norm outputs not implemented.
            return _atan_spike(x, self.alpha, float(norm), float(scale))
        else:
            return _atan_primitive(x, self.alpha)


# ----------------------------- main -----------------------------

if __name__ == "__main__":
    key = jax.random.PRNGKey(0)
    mod = ATanGradRefine(alpha=2.0, spiking=True)
    mod_ns = ATanGradRefine(alpha=2.0, spiking=False)

    # 1) Small NCHW input (short-circuit path), typical SNN usage shape.
    x = jax.random.normal(key, (2, 4, 16, 16), dtype=jnp.float32)
    y = jax.block_until_ready(mod(x, norm=1.0, scale=1.0))
    ref = (x >= 0).astype(x.dtype)
    assert y.shape == x.shape and y.dtype == x.dtype
    assert bool(jnp.all(y == ref))

    # Surrogate-gradient check via custom_vjp (pure-JAX backward).
    g = jax.block_until_ready(jax.grad(lambda t: jnp.sum(mod(t, 1.0, 1.0)))(x))
    g_ref = 2.0 / 2.0 / (1.0 + jnp.square(math.pi / 2 * 2.0 * x))
    assert bool(jnp.allclose(g, g_ref, atol=1e-5))

    # 2) Larger f32 input exercising the Pallas path (lane-aligned).
    k1, k2, k3 = jax.random.split(jax.random.PRNGKey(0), 3)
    xl = jax.random.normal(k1, (2, 4, 128, 128), dtype=jnp.float32)
    yl = jax.block_until_ready(mod(xl, norm=1.0, scale=1.0))
    assert bool(jnp.all(yl == (xl >= 0).astype(xl.dtype)))

    # Non-spiking (atan) path on the same large tensor.
    yl2 = jax.block_until_ready(mod_ns(xl))
    refl2 = jnp.arctan(math.pi / 2 * 2.0 * xl) / math.pi + 0.5
    assert bool(jnp.allclose(yl2, refl2, atol=1e-5))

    # 3) bf16 input: exercises dtype-aware (16-sublane) tiling.
    xb = jax.random.normal(k2, (2, 8, 128, 128), dtype=jnp.bfloat16)
    yb = jax.block_until_ready(mod(xb, norm=1.0, scale=1.0))
    assert yb.dtype == xb.dtype
    assert bool(jnp.all(yb == (xb >= 0).astype(xb.dtype)))

    # 4) Ragged (non-multiple-of-128) large shape: Pallas prefix + jnp tail.
    xr = jax.random.normal(k3, (3, 5, 67, 67), dtype=jnp.float32)  # 67335 elems
    yr = jax.block_until_ready(mod(xr, norm=1.0, scale=1.0))
    assert yr.shape == xr.shape
    assert bool(jnp.all(yr == (xr >= 0).astype(xr.dtype)))

    print("KERNEL_OK")
</pallas_src>

<mosaic_0001>
module attributes {stable_mosaic.version = 11 : i64} {
  func.func @_heaviside_kernel(%arg0: i32, %arg1: memref<256x128xf32, #tpu.memory_space<vmem>>, %arg2: memref<256x128xf32, #tpu.memory_space<vmem>>) attributes {dimension_semantics = [#tpu.dimension_semantics<parallel>], iteration_bounds = array<i64: 4>, scalar_prefetch = 0 : i64, scratch_operands = 0 : i64, tpu.core_type = #tpu.core_type<tc>, window_params = [{transform_indices = @transform_0, window_bounds = array<i64: 256, 128>}, {transform_indices = @transform_1, window_bounds = array<i64: 256, 128>}]} {
    %c0 = arith.constant 0 : index
    %c0_0 = arith.constant 0 : index
    %0 = vector.load %arg1[%c0, %c0_0] : memref<256x128xf32, #tpu.memory_space<vmem>>, vector<256x128xf32>
    %cst = arith.constant 0.000000e+00 : f32
    %1 = vector.broadcast %cst : f32 to vector<256x128xf32>
    %2 = arith.cmpf oge, %0, %1 : vector<256x128xf32>
    %3 = arith.extui %2 : vector<256x128xi1> to vector<256x128xi32>
    %4 = arith.sitofp %3 : vector<256x128xi32> to vector<256x128xf32>
    %c0_1 = arith.constant 0 : index
    %c0_2 = arith.constant 0 : index
    %5 = vector.load %arg2[%c0_1, %c0_2] : memref<256x128xf32, #tpu.memory_space<vmem>>, vector<256x128xf32>
    tpu.vector_store %arg2[%c0_1, %c0_2], %4 {strides = array<i32>} : memref<256x128xf32, #tpu.memory_space<vmem>>, vector<256x128xf32>,
    return
  }
  func.func @transform_0(%arg0: i32) -> (i32, i32) {
    %c0_i32 = arith.constant 0 : i32
    %c0_i32_0 = arith.constant 0 : i32
    return %arg0, %c0_i32 : i32, i32
  }
  func.func @transform_1(%arg0: i32) -> (i32, i32) {
    %c0_i32 = arith.constant 0 : i32
    %c0_i32_0 = arith.constant 0 : i32
    return %arg0, %c0_i32 : i32, i32
  }
}

</mosaic_0001>

<llo_original>
// kernel: tpu_custom_call.1
$region0: #{tpu_custom_call.1}
  #allocation0 [shape = 'u32[]', space=smem, size = 0x4, offset = 0x4, fixed_abs, tag = 'smem constant byte address 0x4 - core index']
  #allocation1 [shape = 'u32[72,128]{1,0:T(1,128)}', space=vmem, size = 0x9000, scoped, tag = 'internal scratch']
  %s0 = inlined_call_operand.hbm [shape: f32[1024,128], index: 0, kind: input, shape index: {}]
  %s1 = inlined_call_operand.hbm [shape: f32[1024,128], index: 1, kind: output, shape index: {}]
  %s2 = sld [smem:[#allocation0]]
  $region41: #{tpu_custom_call.1} parent=0
    _
  %s4 = ssub.s32 1, %s2
  %s5 = scalar_select 0, %s4, %s2
  $region1: #{tpu_custom_call.1} parent=0
    #allocation2 [shape = 'u8[262144]{0}', space=vmem, size = 0x40000, scoped, tag = 'input window, operand 0']
    #allocation3 [shape = 's32[2]{0}', space=sflag, size = 0x8, scoped, tag = 'scoped memory for tpu_custom_call.1']
    #allocation4 [shape = 's32[2]{0}', space=sflag, size = 0x8, scoped, tag = 'scoped memory for tpu_custom_call.1']
    #allocation5 [shape = 'u8[262144]{0}', space=vmem, size = 0x40000, scoped, tag = 'output window, operand 0']
    %6 = vsyncpa [#allocation3], 0
    %s7 = scalar_lea.sflag [#allocation3], 1
    %8 = vsyncpa %s7, 0
    %9 = vsyncpa [#allocation4], 0
    %s10 = scalar_lea.sflag [#allocation4], 1
    %11 = vsyncpa %s10, 0
    loop: start=0, step=1, limit=6
    $region2: #{tpu_custom_call.1} parent=1 // loop_pre_header
      _
    $region3: #{tpu_custom_call.1} parent=1 // loop_header
      %s13 = sphi 0, %s17
      %p14 = scmp.ge.s32.totalorder %s13, 6
      %s23 = sphi 0, %s25
      %s26 = sphi 0, %s23
      %s27 = sphi 0, %s26
      %s43 = sphi 0, %s27
      %s49 = sphi 0, %s51
      %s52 = sphi 0, %s49
      %s53 = sphi 0, %s52
      %s69 = sphi 0, %s53
    $region4: #{tpu_custom_call.1} parent=1 // loop_header_branch
      %16 = sbr.rel (%p14) target = $region8
    $region5: #{tpu_custom_call.1} parent=1 // loop_body
      %s18 = ssub.s32 %s13, 1
      %s19 = ssub.s32 %s13, 2
      %s20 = sadd.s32 %s13, 1
      %s21 = ssub.s32 %s13, %s20
      %p22 = scmp.eq.s32.totalorder %s21, 0
      %s24 = sadd.s32 %s23, 1
      %s25 = scalar_select %p22, %s23, %s24
      %p28 = pneg %p22
      %p29 = scmp.eq.s32.totalorder %s13, 3
      %p30 = por %p28, %p29
      %p31 = scmp.ne.s32.totalorder %s23, %s26
      %p32 = scmp.eq.s32.totalorder %s13, 0
      %p33 = por %p31, %p32
      %p34 = scmp.ne.s32.totalorder %s23, %s26
      %p35 = scmp.eq.s32.totalorder %s18, 3
      %p36 = por %p34, %p35
      %p37 = scmp.ne.s32.totalorder %s26, %s27
      %p38 = scmp.eq.s32.totalorder %s18, 0
      %p39 = por %p37, %p38
      %p40 = scmp.ne.s32.totalorder %s26, %s27
      %p41 = scmp.eq.s32.totalorder %s19, 3
      %p42 = por %p40, %p41
      %p44 = scmp.ne.s32.totalorder %s27, %s43
      %p45 = scmp.eq.s32.totalorder %s19, 0
      %p46 = por %p44, %p45
      %s47 = ssub.s32 %s13, %s20
      %p48 = scmp.eq.s32.totalorder %s47, 0
      %s50 = sadd.s32 %s49, 1
      %s51 = scalar_select %p48, %s49, %s50
      %p54 = pneg %p48
      %p55 = scmp.eq.s32.totalorder %s13, 3
      %p56 = por %p54, %p55
      %p57 = scmp.ne.s32.totalorder %s49, %s52
      %p58 = scmp.eq.s32.totalorder %s13, 0
      %p59 = por %p57, %p58
      %p60 = scmp.ne.s32.totalorder %s49, %s52
      %p61 = scmp.eq.s32.totalorder %s18, 3
      %p62 = por %p60, %p61
      %p63 = scmp.ne.s32.totalorder %s52, %s53
      %p64 = scmp.eq.s32.totalorder %s18, 0
      %p65 = por %p63, %p64
      %p66 = scmp.ne.s32.totalorder %s52, %s53
      %p67 = scmp.eq.s32.totalorder %s19, 3
      %p68 = por %p66, %p67
      %p70 = scmp.ne.s32.totalorder %s53, %s69
      %p71 = scmp.eq.s32.totalorder %s19, 0
      %p72 = por %p70, %p71
      %p73 = scmp.le.s32.totalorder 1, %s13
      %p74 = scmp.lt.s32.totalorder %s13, 5
      %p75 = pnand %p73, %p74
      %p76 = pneg %p75
      // Predicated region
      $region9: #{tpu_custom_call.1} parent=5 // pred_check
        _
      $region10: #{tpu_custom_call.1} parent=5 // pred_check_branch
        %78 = sbr.rel (%p75) target = $region12
      $region11: #{tpu_custom_call.1} parent=5 // pred_region
        %s79 = ssub.s32 %s13, 1
      $region12: #{tpu_custom_call.1} parent=5 // pred_fallthru
        _
      %p80 = scmp.lt.s32.totalorder %s13, 4
      // Predicated region
      $region13: #{tpu_custom_call.1} parent=5 // pred_check
        %p81 = pneg %p80
      $region14: #{tpu_custom_call.1} parent=5 // pred_check_branch
        %83 = sbr.rel (%p81) target = $region16
      $region15: #{tpu_custom_call.1} parent=5 // pred_region
        // Predicated region
        $region17: #{tpu_custom_call.1} parent=15 // pred_check
          %p84 = pneg %p33
        $region18: #{tpu_custom_call.1} parent=15 // pred_check_branch
          %86 = sbr.rel (%p84) target = $region20
        $region19: #{tpu_custom_call.1} parent=15 // pred_region
          %s87 = sand.u32 %s23, 1
          %s88 = scalar_lea.sflag [#allocation3], %s87
          %s89 = sand.u32 %s23, 1
          %s90 = smul.addr %s89, 256
          %s91 = scalar_lea.vmem [#allocation2], %s90
          %s92 = smul.u32 32, %s13
          %94 = vsyncadd %s88, 0
          %s95 = smul.addr %s92, 8
          %s96 = scalar_lea.hbm %s0, %s95
          %s97 = sshll.u32 %s96, 4
          %s98 = int_to_ptr.hbm [resolvable:$true] %s97
          %s99 = sshll.u32 %s91, 4
          %s100 = int_to_ptr.vmem [resolvable:$true] %s99
          %105 = dma.hbm_to_vmem [thread:$0]  %s98, 4096, %s100, %s88, 128, 128, 8
        $region20: #{tpu_custom_call.1} parent=15 // pred_fallthru
          _
      $region16: #{tpu_custom_call.1} parent=5 // pred_fallthru
        _
      %p106 = scmp.le.s32.totalorder 1, %s13
      %p107 = scmp.lt.s32.totalorder %s13, 5
      %p108 = pnand %p106, %p107
      %p109 = pneg %p108
      // Predicated region
      $region21: #{tpu_custom_call.1} parent=5 // pred_check
        _
      $region22: #{tpu_custom_call.1} parent=5 // pred_check_branch
        %111 = sbr.rel (%p108) target = $region24
      $region23: #{tpu_custom_call.1} parent=5 // pred_region
        %s112 = ssub.s32 %s13, 1
        %s113 = sand.u32 %s26, 1
        %s114 = scalar_lea.sflag [#allocation3], %s113
        %s115 = sand.u32 %s26, 1
        %s116 = smul.addr %s115, 256
        %s117 = scalar_lea.vmem [#allocation2], %s116
        // Predicated region
        $region25: #{tpu_custom_call.1} parent=23 // pred_check
          %p118 = pneg %p39
        $region26: #{tpu_custom_call.1} parent=23 // pred_check_branch
          %120 = sbr.rel (%p118) target = $region28
        $region27: #{tpu_custom_call.1} parent=23 // pred_region
          %122 = dma.done %s114, 4096
        $region28: #{tpu_custom_call.1} parent=23 // pred_fallthru
          _
        %s123 = sand.u32 %s26, 1
        %s124 = scalar_lea.sflag [#allocation3], %s123
        %s125 = sand.u32 %s26, 1
        %s126 = smul.addr %s125, 256
        %s127 = scalar_lea.vmem [#allocation2], %s126
        %p128 = pneg %p39
        %p129 = pneg %p36
        %p130 = pneg %p65
        %p131 = pneg %p62
        %s132 = sand.u32 %s52, 1
        %s133 = scalar_lea.sflag [#allocation4], %s132
        %s134 = sand.u32 %s52, 1
        %s135 = smul.addr %s134, 256
        %s136 = scalar_lea.vmem [#allocation5], %s135
        %s137 = smul.u32 32, %s18
        %s138 = smul.u32 32, %s18
        %v139 = vld [vmem:[%s117] sm:$0xff]
        %v140 = vld [vmem:[%s117 + $0x8] sm:$0xff]
        %v141 = vld [vmem:[%s117 + $0x10] sm:$0xff]
        %v142 = vld [vmem:[%s117 + $0x18] sm:$0xff]
        %v143 = vld [vmem:[%s117 + $0x20] sm:$0xff]
        %v144 = vld [vmem:[%s117 + $0x28] sm:$0xff]
        %v145 = vld [vmem:[%s117 + $0x30] sm:$0xff]
        %v146 = vld [vmem:[%s117 + $0x38] sm:$0xff]
        %v147 = vld [vmem:[%s117 + $0x40] sm:$0xff]
        %v148 = vld [vmem:[%s117 + $0x48] sm:$0xff]
        %v149 = vld [vmem:[%s117 + $0x50] sm:$0xff]
        %v150 = vld [vmem:[%s117 + $0x58] sm:$0xff]
        %v151 = vld [vmem:[%s117 + $0x60] sm:$0xff]
        %v152 = vld [vmem:[%s117 + $0x68] sm:$0xff]
        %v153 = vld [vmem:[%s117 + $0x70] sm:$0xff]
        %v154 = vld [vmem:[%s117 + $0x78] sm:$0xff]
        %v155 = vld [vmem:[%s117 + $0x80] sm:$0xff]
        %v156 = vld [vmem:[%s117 + $0x88] sm:$0xff]
        %v157 = vld [vmem:[%s117 + $0x90] sm:$0xff]
        %v158 = vld [vmem:[%s117 + $0x98] sm:$0xff]
        %v159 = vld [vmem:[%s117 + $0xa0] sm:$0xff]
        %v160 = vld [vmem:[%s117 + $0xa8] sm:$0xff]
        %v161 = vld [vmem:[%s117 + $0xb0] sm:$0xff]
        %v162 = vld [vmem:[%s117 + $0xb8] sm:$0xff]
        %v163 = vld [vmem:[%s117 + $0xc0] sm:$0xff]
        %v164 = vld [vmem:[%s117 + $0xc8] sm:$0xff]
        %v165 = vld [vmem:[%s117 + $0xd0] sm:$0xff]
        %v166 = vld [vmem:[%s117 + $0xd8] sm:$0xff]
        %v167 = vld [vmem:[%s117 + $0xe0] sm:$0xff]
        %v168 = vld [vmem:[%s117 + $0xe8] sm:$0xff]
        %v169 = vld [vmem:[%s117 + $0xf0] sm:$0xff]
        %v170 = vld [vmem:[%s117 + $0xf8] sm:$0xff]
        %vm171 = vcmp.ge.f32.partialorder %v139, 0.0
        %vm172 = vcmp.ge.f32.partialorder %v140, 0.0
        %vm173 = vcmp.ge.f32.partialorder %v141, 0.0
        %vm174 = vcmp.ge.f32.partialorder %v142, 0.0
        %vm175 = vcmp.ge.f32.partialorder %v143, 0.0
        %vm176 = vcmp.ge.f32.partialorder %v144, 0.0
        %vm177 = vcmp.ge.f32.partialorder %v145, 0.0
        %vm178 = vcmp.ge.f32.partialorder %v146, 0.0
        %vm179 = vcmp.ge.f32.partialorder %v147, 0.0
        %vm180 = vcmp.ge.f32.partialorder %v148, 0.0
        %vm181 = vcmp.ge.f32.partialorder %v149, 0.0
        %vm182 = vcmp.ge.f32.partialorder %v150, 0.0
        %vm183 = vcmp.ge.f32.partialorder %v151, 0.0
        %vm184 = vcmp.ge.f32.partialorder %v152, 0.0
        %vm185 = vcmp.ge.f32.partialorder %v153, 0.0
        %vm186 = vcmp.ge.f32.partialorder %v154, 0.0
        %vm187 = vcmp.ge.f32.partialorder %v155, 0.0
        %vm188 = vcmp.ge.f32.partialorder %v156, 0.0
        %vm189 = vcmp.ge.f32.partialorder %v157, 0.0
        %vm190 = vcmp.ge.f32.partialorder %v158, 0.0
        %vm191 = vcmp.ge.f32.partialorder %v159, 0.0
        %vm192 = vcmp.ge.f32.partialorder %v160, 0.0
        %vm193 = vcmp.ge.f32.partialorder %v161, 0.0
        %vm194 = vcmp.ge.f32.partialorder %v162, 0.0
        %vm195 = vcmp.ge.f32.partialorder %v163, 0.0
        %vm196 = vcmp.ge.f32.partialorder %v164, 0.0
        %vm197 = vcmp.ge.f32.partialorder %v165, 0.0
        %vm198 = vcmp.ge.f32.partialorder %v166, 0.0
        %vm199 = vcmp.ge.f32.partialorder %v167, 0.0
        %vm200 = vcmp.ge.f32.partialorder %v168, 0.0
        %vm201 = vcmp.ge.f32.partialorder %v169, 0.0
        %vm202 = vcmp.ge.f32.partialorder %v170, 0.0
        %v203 = vsel %vm171, 1, 0
        %v204 = vsel %vm172, 1, 0
        %v205 = vsel %vm173, 1, 0
        %v206 = vsel %vm174, 1, 0
        %v207 = vsel %vm175, 1, 0
        %v208 = vsel %vm176, 1, 0
        %v209 = vsel %vm177, 1, 0
        %v210 = vsel %vm178, 1, 0
        %v211 = vsel %vm179, 1, 0
        %v212 = vsel %vm180, 1, 0
        %v213 = vsel %vm181, 1, 0
        %v214 = vsel %vm182, 1, 0
        %v215 = vsel %vm183, 1, 0
        %v216 = vsel %vm184, 1, 0
        %v217 = vsel %vm185, 1, 0
        %v218 = vsel %vm186, 1, 0
        %v219 = vsel %vm187, 1, 0
        %v220 = vsel %vm188, 1, 0
        %v221 = vsel %vm189, 1, 0
        %v222 = vsel %vm190, 1, 0
        %v223 = vsel %vm191, 1, 0
        %v224 = vsel %vm192, 1, 0
        %v225 = vsel %vm193, 1, 0
        %v226 = vsel %vm194, 1, 0
        %v227 = vsel %vm195, 1, 0
        %v228 = vsel %vm196, 1, 0
        %v229 = vsel %vm197, 1, 0
        %v230 = vsel %vm198, 1, 0
        %v231 = vsel %vm199, 1, 0
        %v232 = vsel %vm200, 1, 0
        %v233 = vsel %vm201, 1, 0
        %v234 = vsel %vm202, 1, 0
        %v235 = vcvt.s32.f32 %v203
        %v236 = vcvt.s32.f32 %v204
        %v237 = vcvt.s32.f32 %v205
        %v238 = vcvt.s32.f32 %v206
        %v239 = vcvt.s32.f32 %v207
        %v240 = vcvt.s32.f32 %v208
        %v241 = vcvt.s32.f32 %v209
        %v242 = vcvt.s32.f32 %v210
        %v243 = vcvt.s32.f32 %v211
        %v244 = vcvt.s32.f32 %v212
        %v245 = vcvt.s32.f32 %v213
        %v246 = vcvt.s32.f32 %v214
        %v247 = vcvt.s32.f32 %v215
        %v248 = vcvt.s32.f32 %v216
        %v249 = vcvt.s32.f32 %v217
        %v250 = vcvt.s32.f32 %v218
        %v251 = vcvt.s32.f32 %v219
        %v252 = vcvt.s32.f32 %v220
        %v253 = vcvt.s32.f32 %v221
        %v254 = vcvt.s32.f32 %v222
        %v255 = vcvt.s32.f32 %v223
        %v256 = vcvt.s32.f32 %v224
        %v257 = vcvt.s32.f32 %v225
        %v258 = vcvt.s32.f32 %v226
        %v259 = vcvt.s32.f32 %v227
        %v260 = vcvt.s32.f32 %v228
        %v261 = vcvt.s32.f32 %v229
        %v262 = vcvt.s32.f32 %v230
        %v263 = vcvt.s32.f32 %v231
        %v264 = vcvt.s32.f32 %v232
        %v265 = vcvt.s32.f32 %v233
        %v266 = vcvt.s32.f32 %v234
        %267 = vst [vmem:[%s136] sm:$0xff] %v235
        %268 = vst [vmem:[%s136 + $0x8] sm:$0xff] %v236
        %269 = vst [vmem:[%s136 + $0x10] sm:$0xff] %v237
        %270 = vst [vmem:[%s136 + $0x18] sm:$0xff] %v238
        %271 = vst [vmem:[%s136 + $0x20] sm:$0xff] %v239
        %272 = vst [vmem:[%s136 + $0x28] sm:$0xff] %v240
        %273 = vst [vmem:[%s136 + $0x30] sm:$0xff] %v241
        %274 = vst [vmem:[%s136 + $0x38] sm:$0xff] %v242
        %275 = vst [vmem:[%s136 + $0x40] sm:$0xff] %v243
        %276 = vst [vmem:[%s136 + $0x48] sm:$0xff] %v244
        %277 = vst [vmem:[%s136 + $0x50] sm:$0xff] %v245
        %278 = vst [vmem:[%s136 + $0x58] sm:$0xff] %v246
        %279 = vst [vmem:[%s136 + $0x60] sm:$0xff] %v247
        %280 = vst [vmem:[%s136 + $0x68] sm:$0xff] %v248
        %281 = vst [vmem:[%s136 + $0x70] sm:$0xff] %v249
        %282 = vst [vmem:[%s136 + $0x78] sm:$0xff] %v250
        %283 = vst [vmem:[%s136 + $0x80] sm:$0xff] %v251
        %284 = vst [vmem:[%s136 + $0x88] sm:$0xff] %v252
        %285 = vst [vmem:[%s136 + $0x90] sm:$0xff] %v253
        %286 = vst [vmem:[%s136 + $0x98] sm:$0xff] %v254
        %287 = vst [vmem:[%s136 + $0xa0] sm:$0xff] %v255
        %288 = vst [vmem:[%s136 + $0xa8] sm:$0xff] %v256
        %289 = vst [vmem:[%s136 + $0xb0] sm:$0xff] %v257
        %290 = vst [vmem:[%s136 + $0xb8] sm:$0xff] %v258
        %291 = vst [vmem:[%s136 + $0xc0] sm:$0xff] %v259
        %292 = vst [vmem:[%s136 + $0xc8] sm:$0xff] %v260
        %293 = vst [vmem:[%s136 + $0xd0] sm:$0xff] %v261
        %294 = vst [vmem:[%s136 + $0xd8] sm:$0xff] %v262
        %295 = vst [vmem:[%s136 + $0xe0] sm:$0xff] %v263
        %296 = vst [vmem:[%s136 + $0xe8] sm:$0xff] %v264
        %297 = vst [vmem:[%s136 + $0xf0] sm:$0xff] %v265
        %298 = vst [vmem:[%s136 + $0xf8] sm:$0xff] %v266
        %s299 = sand.u32 %s52, 1
        %s300 = scalar_lea.sflag [#allocation4], %s299
        %s301 = sand.u32 %s52, 1
        %s302 = smul.addr %s301, 256
        %s303 = scalar_lea.vmem [#allocation5], %s302
        // Predicated region
        $region29: #{tpu_custom_call.1} parent=23 // pred_check
          %p304 = pneg %p62
        $region30: #{tpu_custom_call.1} parent=23 // pred_check_branch
          %306 = sbr.rel (%p304) target = $region32
        $region31: #{tpu_custom_call.1} parent=23 // pred_region
          %s307 = smul.u32 32, %s18
          %309 = vsyncadd %s300, 0
          %s310 = smul.addr %s307, 8
          %s311 = scalar_lea.hbm %s1, %s310
          %s312 = sshll.u32 %s303, 4
          %s313 = int_to_ptr.vmem [resolvable:$true] %s312
          %s314 = sshll.u32 %s311, 4
          %s315 = int_to_ptr.hbm [resolvable:$true] %s314
          %320 = dma.vmem_to_hbm [thread:$0]  %s313, 4096, %s315, %s300, 128, 128, 8
        $region32: #{tpu_custom_call.1} parent=23 // pred_fallthru
          _
      $region24: #{tpu_custom_call.1} parent=5 // pred_fallthru
        _
      %p321 = scmp.le.s32.totalorder 2, %s13
      // Predicated region
      $region33: #{tpu_custom_call.1} parent=5 // pred_check
        %p322 = pneg %p321
      $region34: #{tpu_custom_call.1} parent=5 // pred_check_branch
        %324 = sbr.rel (%p322) target = $region36
      $region35: #{tpu_custom_call.1} parent=5 // pred_region
        %s325 = ssub.s32 %s13, 2
        // Predicated region
        $region37: #{tpu_custom_call.1} parent=35 // pred_check
          %p326 = pneg %p68
        $region38: #{tpu_custom_call.1} parent=35 // pred_check_branch
          %328 = sbr.rel (%p326) target = $region40
        $region39: #{tpu_custom_call.1} parent=35 // pred_region
          %s329 = sand.u32 %s53, 1
          %s330 = scalar_lea.sflag [#allocation4], %s329
          %s331 = sand.u32 %s53, 1
          %s332 = smul.addr %s331, 256
          %s333 = scalar_lea.vmem [#allocation5], %s332
          %335 = dma.done %s330, 4096
        $region40: #{tpu_custom_call.1} parent=35 // pred_fallthru
          _
      $region36: #{tpu_custom_call.1} parent=5 // pred_fallthru
        _
    $region6: #{tpu_custom_call.1} parent=1 // loop_footer
      %s17 = sadd.s32 1, %s13
    $region7: #{tpu_custom_call.1} parent=1 // loop_footer_branch
      %12 = sbr.rel target = $region3
    $region8: #{tpu_custom_call.1} parent=1 // loop_exit
      _
    %336 = vsyncpa [#allocation3], 1
    %s337 = scalar_lea.sflag [#allocation3], 1
    %338 = vsyncpa %s337, 1
    %339 = vsyncpa [#allocation4], 1
    %s340 = scalar_lea.sflag [#allocation4], 1
    %341 = vsyncpa %s340, 1

</llo_original>
